<compile_context>
chip_gen: v7x
topology: tpu7x:2x2x1
jax: 0.10.0
libtpu: 0.0.40
codegen_flags: <defaults>
</compile_context>

<pallas_src>
import functools

import jax
import jax.numpy as jnp
from jax.experimental import pallas as pl
from jax.experimental.pallas import tpu as pltpu


def _round_up(n, m):
    return ((n + m - 1) // m) * m


def _ffn_ln_kernel(x_ref, w1_ref, b1_ref, w2_ref, pgb_ref, o_ref, *, d_valid):
    # x_ref: (tile_m, Dp) tile of tokens, native dtype (no f32 upcast before MXU).
    x = x_ref[...]

    # w_1 (1x1 conv == linear d_in -> d_hid), f32 accumulation, then bias + ReLU.
    h = jnp.dot(x, w1_ref[...], preferred_element_type=jnp.float32)
    h = jnp.maximum(h + b1_ref[...].astype(jnp.float32), 0.0)
    # Cast back to the weight dtype before the second MXU matmul.
    h = h.astype(w2_ref.dtype)

    # w_2 (1x1 conv == linear d_hid -> d_in), f32 accumulation.
    y = jnp.dot(h, w2_ref[...], preferred_element_type=jnp.float32)

    pgb = pgb_ref[...].astype(jnp.float32)   # (3, Dp): rows = b2, gamma, beta
    b2 = pgb[0:1, :]
    gamma = pgb[1:2, :]
    beta = pgb[2:3, :]

    # Residual add.  Padded lanes of x, b2 and the matmul output are zero,
    # so padded lanes of z are exactly zero.
    z = y + b2 + x.astype(jnp.float32)

    # LayerNorm over the true feature width (eps = 1e-5, PyTorch default).
    # Single pass: sum and sum-of-squares; padded (zero) lanes contribute nothing.
    inv_d = jnp.float32(1.0 / d_valid)
    sum_z = jnp.sum(z, axis=-1, keepdims=True)
    sum_zz = jnp.sum(z * z, axis=-1, keepdims=True)
    mean = sum_z * inv_d
    var = sum_zz * inv_d - mean * mean
    normed = (z - mean) * jax.lax.rsqrt(var + 1e-5)

    # gamma/beta are zero on padded lanes -> padded output lanes are zero.
    o_ref[...] = (normed * gamma + beta).astype(o_ref.dtype)


def positionwise_ffn(x, w1, b1, w2, b2, gamma, beta, *, tile_m=None):
    """x: (B, L, d_in). w1: (d_in, d_hid), w2: (d_hid, d_in)."""
    B, L, d_in = x.shape
    d_hid = w1.shape[1]
    M = B * L

    # Lane-pad feature dims to multiples of 128 (lane width / MXU alignment).
    Dp = _round_up(d_in, 128)
    Hp = _round_up(d_hid, 128)

    # Fixed row tile (multiple of 8 sublanes); never default to the full problem.
    if tile_m is None:
        tile_m = min(512, _round_up(M, 8))
    tile_m = _round_up(tile_m, 8)
    Mp = _round_up(M, tile_m)

    x2 = x.reshape(M, d_in)
    x2 = jnp.pad(x2, ((0, Mp - M), (0, Dp - d_in)))
    w1p = jnp.pad(w1, ((0, Dp - d_in), (0, Hp - d_hid)))
    w2p = jnp.pad(w2, ((0, Hp - d_hid), (0, Dp - d_in)))
    b1p = jnp.pad(b1, (0, Hp - d_hid)).reshape(1, Hp)
    # Pack b2 / gamma / beta into one operand (fewer tiny VMEM residents).
    pgb = jnp.stack(
        [jnp.pad(b2, (0, Dp - d_in)),
         jnp.pad(gamma, (0, Dp - d_in)),
         jnp.pad(beta, (0, Dp - d_in))],
        axis=0,
    )  # (3, Dp)

    kernel = functools.partial(_ffn_ln_kernel, d_valid=d_in)

    out2 = pl.pallas_call(
        kernel,
        out_shape=jax.ShapeDtypeStruct((Mp, Dp), x.dtype),
        grid_spec=pltpu.PrefetchScalarGridSpec(
            num_scalar_prefetch=0,
            grid=(Mp // tile_m,),
            in_specs=[
                pl.BlockSpec((tile_m, Dp), lambda i: (i, 0)),   # x tile
                pl.BlockSpec((Dp, Hp), lambda i: (0, 0)),       # w1 (resident)
                pl.BlockSpec((1, Hp), lambda i: (0, 0)),        # b1
                pl.BlockSpec((Hp, Dp), lambda i: (0, 0)),       # w2 (resident)
                pl.BlockSpec((3, Dp), lambda i: (0, 0)),        # packed b2/gamma/beta
            ],
            out_specs=pl.BlockSpec((tile_m, Dp), lambda i: (i, 0)),
        ),
        compiler_params=pltpu.CompilerParams(
            dimension_semantics=("parallel",),
            # Above the 16/32 MiB scoped defaults, still well below v7x's 64 MiB.
            vmem_limit_bytes=48 * 1024 * 1024,
        ),
    )(x2, w1p, b1p, w2p, pgb)

    return out2[:M, :d_in].reshape(B, L, d_in)


def _reference(x, w1, b1, w2, b2, gamma, beta):
    h = jnp.maximum(jnp.einsum("bld,dh->blh", x, w1) + b1, 0.0)
    y = jnp.einsum("blh,hd->bld", h, w2) + b2
    z = y + x
    mean = jnp.mean(z, axis=-1, keepdims=True)
    var = jnp.mean((z - mean) ** 2, axis=-1, keepdims=True)
    return (z - mean) / jnp.sqrt(var + 1e-5) * gamma + beta


if __name__ == "__main__":
    # Shapes implied by the module: x (batch, seq, d_in); hidden d_hid.
    B, L, d_in, d_hid = 2, 8, 32, 64

    key = jax.random.PRNGKey(0)
    kx, k1, kb1, k2, kb2 = jax.random.split(key, 5)

    x = jax.random.normal(kx, (B, L, d_in), dtype=jnp.float32)

    # Conv1d(d_in, d_hid, 1).weight has shape (d_hid, d_in, 1); equivalent linear
    # weight is (d_hid, d_in). We store the transposed (d_in, d_hid) for x @ W.
    w1 = jax.random.normal(k1, (d_in, d_hid), dtype=jnp.float32) * 0.1
    b1 = jax.random.normal(kb1, (d_hid,), dtype=jnp.float32) * 0.1
    w2 = jax.random.normal(k2, (d_hid, d_in), dtype=jnp.float32) * 0.1
    b2 = jax.random.normal(kb2, (d_in,), dtype=jnp.float32) * 0.1
    gamma = jnp.ones((d_in,), dtype=jnp.float32)   # LayerNorm default init
    beta = jnp.zeros((d_in,), dtype=jnp.float32)

    out = positionwise_ffn(x, w1, b1, w2, b2, gamma, beta)
    out = jax.block_until_ready(out)

    ref = _reference(x, w1, b1, w2, b2, gamma, beta)
    assert out.shape == (B, L, d_in)
    assert jnp.allclose(out, ref, atol=1e-4, rtol=1e-4), "mismatch vs reference"

    print("KERNEL_OK")
</pallas_src>

<mosaic_0001>
module attributes {stable_mosaic.version = 11 : i64} {
  func.func @_ffn_ln_kernel(%arg0: i32, %arg1: memref<16x128xf32, #tpu.memory_space<vmem>>, %arg2: memref<128x128xf32, #tpu.memory_space<vmem>>, %arg3: memref<1x128xf32, #tpu.memory_space<vmem>>, %arg4: memref<128x128xf32, #tpu.memory_space<vmem>>, %arg5: memref<3x128xf32, #tpu.memory_space<vmem>>, %arg6: memref<16x128xf32, #tpu.memory_space<vmem>>) attributes {dimension_semantics = [#tpu.dimension_semantics<parallel>], iteration_bounds = array<i64: 1>, scalar_prefetch = 0 : i64, scratch_operands = 0 : i64, tpu.core_type = #tpu.core_type<tc>, window_params = [{transform_indices = @transform_0, window_bounds = array<i64: 16, 128>}, {pipeline_mode = #tpu.pipeline_mode<synchronous>, transform_indices = @transform_1, window_bounds = array<i64: 128, 128>}, {pipeline_mode = #tpu.pipeline_mode<synchronous>, transform_indices = @transform_2, window_bounds = array<i64: 1, 128>}, {pipeline_mode = #tpu.pipeline_mode<synchronous>, transform_indices = @transform_3, window_bounds = array<i64: 128, 128>}, {pipeline_mode = #tpu.pipeline_mode<synchronous>, transform_indices = @transform_4, window_bounds = array<i64: 3, 128>}, {transform_indices = @transform_5, window_bounds = array<i64: 16, 128>}]} {
    %c0 = arith.constant 0 : index
    %c0_0 = arith.constant 0 : index
    %0 = vector.load %arg1[%c0, %c0_0] : memref<16x128xf32, #tpu.memory_space<vmem>>, vector<16x128xf32>
    %c0_1 = arith.constant 0 : index
    %c0_2 = arith.constant 0 : index
    %1 = vector.load %arg2[%c0_1, %c0_2] : memref<128x128xf32, #tpu.memory_space<vmem>>, vector<128x128xf32>
    %cst = arith.constant dense<0.000000e+00> : vector<16x128xf32>
    %2 = tpu.matmul %0, %1, %cst {dimension_numbers = #tpu.dot_dimension_numbers<[1], [0], [0], [1], [0, 0, 1, 1], [], []>} : vector<16x128xf32>, vector<128x128xf32>, vector<16x128xf32> -> vector<16x128xf32>
    %c0_3 = arith.constant 0 : index
    %c0_4 = arith.constant 0 : index
    %3 = vector.load %arg3[%c0_3, %c0_4] : memref<1x128xf32, #tpu.memory_space<vmem>>, vector<1x128xf32>
    %4 = vector.broadcast %3 : vector<1x128xf32> to vector<16x128xf32>
    %5 = arith.addf %2, %4 : vector<16x128xf32>
    %cst_5 = arith.constant 0.000000e+00 : f32
    %6 = vector.broadcast %cst_5 : f32 to vector<16x128xf32>
    %7 = arith.maximumf %5, %6 : vector<16x128xf32>
    %c0_6 = arith.constant 0 : index
    %c0_7 = arith.constant 0 : index
    %8 = vector.load %arg4[%c0_6, %c0_7] : memref<128x128xf32, #tpu.memory_space<vmem>>, vector<128x128xf32>
    %cst_8 = arith.constant dense<0.000000e+00> : vector<16x128xf32>
    %9 = tpu.matmul %7, %8, %cst_8 {dimension_numbers = #tpu.dot_dimension_numbers<[1], [0], [0], [1], [0, 0, 1, 1], [], []>} : vector<16x128xf32>, vector<128x128xf32>, vector<16x128xf32> -> vector<16x128xf32>
    %c0_9 = arith.constant 0 : index
    %c0_10 = arith.constant 0 : index
    %10 = vector.load %arg5[%c0_9, %c0_10] : memref<3x128xf32, #tpu.memory_space<vmem>>, vector<3x128xf32>
    %11 = vector.extract_strided_slice %10 {offsets = [0, 0], sizes = [1, 128], strides = [1, 1]} : vector<3x128xf32> to vector<1x128xf32>
    %12 = vector.extract_strided_slice %10 {offsets = [1, 0], sizes = [1, 128], strides = [1, 1]} : vector<3x128xf32> to vector<1x128xf32>
    %13 = vector.extract_strided_slice %10 {offsets = [2, 0], sizes = [1, 128], strides = [1, 1]} : vector<3x128xf32> to vector<1x128xf32>
    %14 = vector.broadcast %11 : vector<1x128xf32> to vector<16x128xf32>
    %15 = arith.addf %9, %14 : vector<16x128xf32>
    %16 = arith.addf %15, %0 : vector<16x128xf32>
    %cst_11 = arith.constant dense<0.000000e+00> : vector<16xf32>
    %17 = vector.multi_reduction <add>, %16, %cst_11 [1] : vector<16x128xf32> to vector<16xf32>
    %18 = vector.shape_cast %17 : vector<16xf32> to vector<16x1xf32>
    %19 = arith.mulf %16, %16 : vector<16x128xf32>
    %cst_12 = arith.constant dense<0.000000e+00> : vector<16xf32>
    %20 = vector.multi_reduction <add>, %19, %cst_12 [1] : vector<16x128xf32> to vector<16xf32>
    %21 = vector.shape_cast %20 : vector<16xf32> to vector<16x1xf32>
    %cst_13 = arith.constant 3.125000e-02 : f32
    %22 = vector.broadcast %cst_13 : f32 to vector<16x1xf32>
    %23 = arith.mulf %18, %22 : vector<16x1xf32>
    %cst_14 = arith.constant 3.125000e-02 : f32
    %24 = vector.broadcast %cst_14 : f32 to vector<16x1xf32>
    %25 = arith.mulf %21, %24 : vector<16x1xf32>
    %26 = arith.mulf %23, %23 : vector<16x1xf32>
    %27 = arith.subf %25, %26 : vector<16x1xf32>
    %28 = vector.broadcast %23 : vector<16x1xf32> to vector<16x128xf32>
    %29 = arith.subf %16, %28 : vector<16x128xf32>
    %cst_15 = arith.constant 9.99999974E-6 : f32
    %30 = vector.broadcast %cst_15 : f32 to vector<16x1xf32>
    %31 = arith.addf %27, %30 : vector<16x1xf32>
    %32 = math.rsqrt %31 : vector<16x1xf32>
    %33 = vector.broadcast %32 : vector<16x1xf32> to vector<16x128xf32>
    %34 = arith.mulf %29, %33 : vector<16x128xf32>
    %35 = vector.broadcast %12 : vector<1x128xf32> to vector<16x128xf32>
    %36 = arith.mulf %34, %35 : vector<16x128xf32>
    %37 = vector.broadcast %13 : vector<1x128xf32> to vector<16x128xf32>
    %38 = arith.addf %36, %37 : vector<16x128xf32>
    %c0_16 = arith.constant 0 : index
    %c0_17 = arith.constant 0 : index
    %39 = vector.load %arg6[%c0_16, %c0_17] : memref<16x128xf32, #tpu.memory_space<vmem>>, vector<16x128xf32>
    tpu.vector_store %arg6[%c0_16, %c0_17], %38 {strides = array<i32>} : memref<16x128xf32, #tpu.memory_space<vmem>>, vector<16x128xf32>,
    return
  }
  func.func @transform_0(%arg0: i32) -> (i32, i32) {
    %c0_i32 = arith.constant 0 : i32
    %c0_i32_0 = arith.constant 0 : i32
    return %arg0, %c0_i32 : i32, i32
  }
  func.func @transform_1(%arg0: i32) -> (i32, i32) {
    %c0_i32 = arith.constant 0 : i32
    %c0_i32_0 = arith.constant 0 : i32
    %c0_i32_1 = arith.constant 0 : i32
    return %c0_i32, %c0_i32_0 : i32, i32
  }
  func.func @transform_2(%arg0: i32) -> (i32, i32) {
    %c0_i32 = arith.constant 0 : i32
    %c0_i32_0 = arith.constant 0 : i32
    %c0_i32_1 = arith.constant 0 : i32
    return %c0_i32, %c0_i32_0 : i32, i32
  }
  func.func @transform_3(%arg0: i32) -> (i32, i32) {
    %c0_i32 = arith.constant 0 : i32
    %c0_i32_0 = arith.constant 0 : i32
    %c0_i32_1 = arith.constant 0 : i32
    return %c0_i32, %c0_i32_0 : i32, i32
  }
  func.func @transform_4(%arg0: i32) -> (i32, i32) {
    %c0_i32 = arith.constant 0 : i32
    %c0_i32_0 = arith.constant 0 : i32
    %c0_i32_1 = arith.constant 0 : i32
    return %c0_i32, %c0_i32_0 : i32, i32
  }
  func.func @transform_5(%arg0: i32) -> (i32, i32) {
    %c0_i32 = arith.constant 0 : i32
    %c0_i32_0 = arith.constant 0 : i32
    return %arg0, %c0_i32 : i32, i32
  }
}

</mosaic_0001>

<llo_original>
// kernel: tpu_custom_call.1
$region0: #{tpu_custom_call.1}
  #allocation0 [shape = 'u32[]', space=smem, size = 0x4, offset = 0x4, fixed_abs, tag = 'smem constant byte address 0x4 - core index']
  #allocation1 [shape = 'u32[144,128]{1,0:T(1,128)}', space=vmem, size = 0x12000, scoped, tag = 'internal scratch']
  %s0 = inlined_call_operand.hbm [shape: f32[16,128], index: 0, kind: input, shape index: {}]
  %s1 = inlined_call_operand.hbm [shape: f32[128,128], index: 1, kind: input, shape index: {}]
  %s2 = inlined_call_operand.vmem [shape: f32[1,128], index: 2, kind: input, shape index: {}]
  %s3 = inlined_call_operand.hbm [shape: f32[128,128], index: 3, kind: input, shape index: {}]
  %s4 = inlined_call_operand.vmem [shape: f32[3,128], index: 4, kind: input, shape index: {}]
  %s5 = inlined_call_operand.hbm [shape: f32[16,128], index: 5, kind: output, shape index: {}]
  %s6 = sld [smem:[#allocation0]]
  $region42: #{tpu_custom_call.1} parent=0
    _
  %s8 = ssub.s32 1, %s6
  %s9 = scalar_select 0, %s8, %s6
  $region1: #{tpu_custom_call.1} parent=0
    #allocation2 [shape = 'u8[8192]{0}', space=vmem, size = 0x2000, scoped, tag = 'input window, operand 0, single buffered']
    #allocation3 [shape = 's32[1]{0}', space=sflag, size = 0x4, scoped, tag = 'scoped memory for tpu_custom_call.1']
    #allocation4 [shape = 's32[1]{0}', space=sflag, size = 0x4, scoped, tag = 'scoped memory for tpu_custom_call.1']
    #allocation5 [shape = 'u8[65536]{0}', space=vmem, size = 0x10000, scoped, tag = 'input window, operand 1, single buffered']
    #allocation6 [shape = 's32[1]{0}', space=sflag, size = 0x4, scoped, tag = 'scoped memory for tpu_custom_call.1']
    #allocation7 [shape = 'u8[65536]{0}', space=vmem, size = 0x10000, scoped, tag = 'input window, operand 3, single buffered']
    #allocation8 [shape = 'u8[8192]{0}', space=vmem, size = 0x2000, scoped, tag = 'output window, operand 0, single buffered']
    %10 = vsyncpa [#allocation3], 0
    %11 = vsyncpa [#allocation6], 0
    %12 = vsyncpa [#allocation4], 0
    // Predicated region
    $region2: #{tpu_custom_call.1} parent=1 // pred_check
      _
    $region3: #{tpu_custom_call.1} parent=1 // pred_check_branch
      %14 = sbr.rel (0) target = $region5
    $region4: #{tpu_custom_call.1} parent=1 // pred_region
      %s16 = ssub.s32 256, 256
      %17 = vsyncadd [#allocation3], %s16
      %s18 = sshll.u32 [#allocation2], 4
      %s19 = int_to_ptr.vmem [resolvable:$true] %s18
      %24 = dma.hbm_to_vmem [thread:$0]  %s0, 256, %s19, [#allocation3], 128, 128, 8
    $region5: #{tpu_custom_call.1} parent=1 // pred_fallthru
      _
    // Predicated region
    $region6: #{tpu_custom_call.1} parent=1 // pred_check
      _
    $region7: #{tpu_custom_call.1} parent=1 // pred_check_branch
      %26 = sbr.rel (0) target = $region9
    $region8: #{tpu_custom_call.1} parent=1 // pred_region
      %s28 = ssub.s32 2048, 2048
      %29 = vsyncadd [#allocation6], %s28
      %s30 = sshll.u32 [#allocation5], 4
      %s31 = int_to_ptr.vmem [resolvable:$true] %s30
      %36 = dma.hbm_to_vmem [thread:$0]  %s1, 2048, %s31, [#allocation6], 128, 128, 8
    $region9: #{tpu_custom_call.1} parent=1 // pred_fallthru
      _
    // Predicated region
    $region10: #{tpu_custom_call.1} parent=1 // pred_check
      _
    $region11: #{tpu_custom_call.1} parent=1 // pred_check_branch
      %38 = sbr.rel (0) target = $region13
    $region12: #{tpu_custom_call.1} parent=1 // pred_region
      _
    $region13: #{tpu_custom_call.1} parent=1 // pred_fallthru
      _
    // Predicated region
    $region14: #{tpu_custom_call.1} parent=1 // pred_check
      _
    $region15: #{tpu_custom_call.1} parent=1 // pred_check_branch
      %40 = sbr.rel (0) target = $region17
    $region16: #{tpu_custom_call.1} parent=1 // pred_region
      %s42 = ssub.s32 2048, 2048
      %43 = vsyncadd [#allocation6], %s42
      %s44 = sshll.u32 [#allocation7], 4
      %s45 = int_to_ptr.vmem [resolvable:$true] %s44
      %50 = dma.hbm_to_vmem [thread:$0]  %s3, 2048, %s45, [#allocation6], 128, 128, 8
    $region17: #{tpu_custom_call.1} parent=1 // pred_fallthru
      _
    // Predicated region
    $region18: #{tpu_custom_call.1} parent=1 // pred_check
      _
    $region19: #{tpu_custom_call.1} parent=1 // pred_check_branch
      %52 = sbr.rel (0) target = $region21
    $region20: #{tpu_custom_call.1} parent=1 // pred_region
      _
    $region21: #{tpu_custom_call.1} parent=1 // pred_fallthru
      _
    // Predicated region
    $region22: #{tpu_custom_call.1} parent=1 // pred_check
      _
    $region23: #{tpu_custom_call.1} parent=1 // pred_check_branch
      %54 = sbr.rel (0) target = $region25
    $region24: #{tpu_custom_call.1} parent=1 // pred_region
      %55 = dma.done [#allocation3], 256
    $region25: #{tpu_custom_call.1} parent=1 // pred_fallthru
      _
    // Predicated region
    $region26: #{tpu_custom_call.1} parent=1 // pred_check
      _
    $region27: #{tpu_custom_call.1} parent=1 // pred_check_branch
      %57 = sbr.rel (0) target = $region29
    $region28: #{tpu_custom_call.1} parent=1 // pred_region
      %58 = dma.done [#allocation6], 2048
    $region29: #{tpu_custom_call.1} parent=1 // pred_fallthru
      _
    // Predicated region
    $region30: #{tpu_custom_call.1} parent=1 // pred_check
      _
    $region31: #{tpu_custom_call.1} parent=1 // pred_check_branch
      %60 = sbr.rel (0) target = $region33
    $region32: #{tpu_custom_call.1} parent=1 // pred_region
      %61 = dma.done [#allocation6], 2048
    $region33: #{tpu_custom_call.1} parent=1 // pred_fallthru
      _
    %v62 = vld [vmem:[#allocation2] sm:$0xff]
    %v63 = vld [vmem:[#allocation2 + $0x8] sm:$0xff]
    %v64 = vld [vmem:[#allocation5] sm:$0xff]
    %v65 = vld [vmem:[#allocation5 + $0x8] sm:$0xff]
    %v66 = vld [vmem:[#allocation5 + $0x10] sm:$0xff]
    %v67 = vld [vmem:[#allocation5 + $0x18] sm:$0xff]
    %v68 = vld [vmem:[#allocation5 + $0x20] sm:$0xff]
    %v69 = vld [vmem:[#allocation5 + $0x28] sm:$0xff]
    %v70 = vld [vmem:[#allocation5 + $0x30] sm:$0xff]
    %v71 = vld [vmem:[#allocation5 + $0x38] sm:$0xff]
    %v72 = vld [vmem:[#allocation5 + $0x40] sm:$0xff]
    %v73 = vld [vmem:[#allocation5 + $0x48] sm:$0xff]
    %v74 = vld [vmem:[#allocation5 + $0x50] sm:$0xff]
    %v75 = vld [vmem:[#allocation5 + $0x58] sm:$0xff]
    %v76 = vld [vmem:[#allocation5 + $0x60] sm:$0xff]
    %v77 = vld [vmem:[#allocation5 + $0x68] sm:$0xff]
    %v78 = vld [vmem:[#allocation5 + $0x70] sm:$0xff]
    %v79 = vld [vmem:[#allocation5 + $0x78] sm:$0xff]
    %v80 = vld [vmem:[%s2] sm:$0x1]
    %v82 = vlaneseq
    %v83 = vshrl.u32 %v82, 7
    %v84 = vsub.s32 0, %v83
    %v85 = vrot.slane %v80, %v84
    %87 = vmatprep.subr.mxu0 0.0
    %88 = vmatpush1.msra.mxu0 %v64
    %89 = vmatprep.subr.mxu0 0.0
    %90 = vmatpush1.msra.mxu0 %v65
    %91 = vmatprep.subr.mxu0 0.0
    %92 = vmatpush1.msra.mxu0 %v66
    %93 = vmatprep.subr.mxu0 0.0
    %94 = vmatpush1.msra.mxu0 %v67
    %95 = vmatprep.subr.mxu0 0.0
    %96 = vmatpush1.msra.mxu0 %v68
    %97 = vmatprep.subr.mxu0 0.0
    %98 = vmatpush1.msra.mxu0 %v69
    %99 = vmatprep.subr.mxu0 0.0
    %100 = vmatpush1.msra.mxu0 %v70
    %101 = vmatprep.subr.mxu0 0.0
    %102 = vmatpush1.msra.mxu0 %v71
    %103 = vmatprep.subr.mxu0 0.0
    %104 = vmatpush1.msra.mxu0 %v72
    %105 = vmatprep.subr.mxu0 0.0
    %106 = vmatpush1.msra.mxu0 %v73
    %107 = vmatprep.subr.mxu0 0.0
    %108 = vmatpush1.msra.mxu0 %v74
    %109 = vmatprep.subr.mxu0 0.0
    %110 = vmatpush1.msra.mxu0 %v75
    %111 = vmatprep.subr.mxu0 0.0
    %112 = vmatpush1.msra.mxu0 %v76
    %113 = vmatprep.subr.mxu0 0.0
    %114 = vmatpush1.msra.mxu0 %v77
    %115 = vmatprep.subr.mxu0 0.0
    %116 = vmatpush1.msra.mxu0 %v78
    %117 = vmatprep.subr.mxu0 0.0
    %118 = vmatpush1.msra.mxu0 %v79
    %119 = vmatprep.subr.mxu0 0.0
    %120 = vmatpush1.msra.mxu0 0.0
    %121 = vmatprep.subr.mxu0 0.0
    %122 = vmatpush1.msra.mxu0 0.0
    %123 = vmatprep.subr.mxu0 0.0
    %124 = vmatpush1.msra.mxu0 0.0
    %125 = vmatprep.subr.mxu0 0.0
    %126 = vmatpush1.msra.mxu0 0.0
    %127 = vmatprep.subr.mxu0 0.0
    %128 = vmatpush1.msra.mxu0 0.0
    %129 = vmatprep.subr.mxu0 0.0
    %130 = vmatpush1.msra.mxu0 0.0
    %131 = vmatprep.subr.mxu0 0.0
    %132 = vmatpush1.msra.mxu0 0.0
    %133 = vmatprep.subr.mxu0 0.0
    %134 = vmatpush1.msra.mxu0 0.0
    %135 = vmatprep.subr.mxu0 0.0
    %136 = vmatpush1.msra.mxu0 0.0
    %137 = vmatprep.subr.mxu0 0.0
    %138 = vmatpush1.msra.mxu0 0.0
    %139 = vmatprep.subr.mxu0 0.0
    %140 = vmatpush1.msra.mxu0 0.0
    %141 = vmatprep.subr.mxu0 0.0
    %142 = vmatpush1.msra.mxu0 0.0
    %143 = vmatprep.subr.mxu0 0.0
    %144 = vmatpush1.msra.mxu0 0.0
    %145 = vmatprep.subr.mxu0 0.0
    %146 = vmatpush1.msra.mxu0 0.0
    %147 = vmatprep.subr.mxu0 0.0
    %148 = vmatpush1.msra.mxu0 0.0
    %149 = vmatprep.subr.mxu0 0.0
    %150 = vmatpush1.msra.mxu0 0.0
    %151 = vmatprep.mubr.f32.mxu0 0.0
    %152 = vmatmul.mubr.f32.gmra.mrb[0].mxu0 %v62
    %v153 = vpop.f32.mrb[0].mxu0
    %v154 = vadd.f32 %v85, %v153
    %v155 = vpop.f32.mrb[0].mxu0
    %156 = vmatprep.mubr.f32.mxu0 0.0
    %157 = vmatmul.mubr.f32.gmra.mrb[0].mxu0 %v63
    %v158 = vpop.f32.mrb[0].mxu0
    %v159 = vadd.f32 %v85, %v158
    %v160 = vpop.f32.mrb[0].mxu0
    %161 = vdwg.mxu0
    %v162 = vmax.f32 %v154, 0.0
    %v163 = vmax.f32 %v159, 0.0
    %v164 = vld [vmem:[#allocation7] sm:$0xff]
    %v165 = vld [vmem:[#allocation7 + $0x8] sm:$0xff]
    %v166 = vld [vmem:[#allocation7 + $0x10] sm:$0xff]
    %v167 = vld [vmem:[#allocation7 + $0x18] sm:$0xff]
    %v168 = vld [vmem:[#allocation7 + $0x20] sm:$0xff]
    %v169 = vld [vmem:[#allocation7 + $0x28] sm:$0xff]
    %v170 = vld [vmem:[#allocation7 + $0x30] sm:$0xff]
    %v171 = vld [vmem:[#allocation7 + $0x38] sm:$0xff]
    %v172 = vld [vmem:[#allocation7 + $0x40] sm:$0xff]
    %v173 = vld [vmem:[#allocation7 + $0x48] sm:$0xff]
    %v174 = vld [vmem:[#allocation7 + $0x50] sm:$0xff]
    %v175 = vld [vmem:[#allocation7 + $0x58] sm:$0xff]
    %v176 = vld [vmem:[#allocation7 + $0x60] sm:$0xff]
    %v177 = vld [vmem:[#allocation7 + $0x68] sm:$0xff]
    %v178 = vld [vmem:[#allocation7 + $0x70] sm:$0xff]
    %v179 = vld [vmem:[#allocation7 + $0x78] sm:$0xff]
    %v180 = vld [vmem:[%s4] sm:$0x7]
    %v181 = vlaneseq
    %v182 = vshrl.u32 %v181, 7
    %v183 = vsub.s32 0, %v182
    %v184 = vrot.slane %v180, %v183
    %185 = vmatprep.subr.mxu0 0.0
    %186 = vmatpush1.msra.mxu0 %v164
    %187 = vmatprep.subr.mxu0 0.0
    %188 = vmatpush1.msra.mxu0 %v165
    %189 = vmatprep.subr.mxu0 0.0
    %190 = vmatpush1.msra.mxu0 %v166
    %191 = vmatprep.subr.mxu0 0.0
    %192 = vmatpush1.msra.mxu0 %v167
    %193 = vmatprep.subr.mxu0 0.0
    %194 = vmatpush1.msra.mxu0 %v168
    %195 = vmatprep.subr.mxu0 0.0
    %196 = vmatpush1.msra.mxu0 %v169
    %197 = vmatprep.subr.mxu0 0.0
    %198 = vmatpush1.msra.mxu0 %v170
    %199 = vmatprep.subr.mxu0 0.0
    %200 = vmatpush1.msra.mxu0 %v171
    %201 = vmatprep.subr.mxu0 0.0
    %202 = vmatpush1.msra.mxu0 %v172
    %203 = vmatprep.subr.mxu0 0.0
    %204 = vmatpush1.msra.mxu0 %v173
    %205 = vmatprep.subr.mxu0 0.0
    %206 = vmatpush1.msra.mxu0 %v174
    %207 = vmatprep.subr.mxu0 0.0
    %208 = vmatpush1.msra.mxu0 %v175
    %209 = vmatprep.subr.mxu0 0.0
    %210 = vmatpush1.msra.mxu0 %v176
    %211 = vmatprep.subr.mxu0 0.0
    %212 = vmatpush1.msra.mxu0 %v177
    %213 = vmatprep.subr.mxu0 0.0
    %214 = vmatpush1.msra.mxu0 %v178
    %215 = vmatprep.subr.mxu0 0.0
    %216 = vmatpush1.msra.mxu0 %v179
    %217 = vmatprep.subr.mxu0 0.0
    %218 = vmatpush1.msra.mxu0 0.0
    %219 = vmatprep.subr.mxu0 0.0
    %220 = vmatpush1.msra.mxu0 0.0
    %221 = vmatprep.subr.mxu0 0.0
    %222 = vmatpush1.msra.mxu0 0.0
    %223 = vmatprep.subr.mxu0 0.0
    %224 = vmatpush1.msra.mxu0 0.0
    %225 = vmatprep.subr.mxu0 0.0
    %226 = vmatpush1.msra.mxu0 0.0
    %227 = vmatprep.subr.mxu0 0.0
    %228 = vmatpush1.msra.mxu0 0.0
    %229 = vmatprep.subr.mxu0 0.0
    %230 = vmatpush1.msra.mxu0 0.0
    %231 = vmatprep.subr.mxu0 0.0
    %232 = vmatpush1.msra.mxu0 0.0
    %233 = vmatprep.subr.mxu0 0.0
    %234 = vmatpush1.msra.mxu0 0.0
    %235 = vmatprep.subr.mxu0 0.0
    %236 = vmatpush1.msra.mxu0 0.0
    %237 = vmatprep.subr.mxu0 0.0
    %238 = vmatpush1.msra.mxu0 0.0
    %239 = vmatprep.subr.mxu0 0.0
    %240 = vmatpush1.msra.mxu0 0.0
    %241 = vmatprep.subr.mxu0 0.0
    %242 = vmatpush1.msra.mxu0 0.0
    %243 = vmatprep.subr.mxu0 0.0
    %244 = vmatpush1.msra.mxu0 0.0
    %245 = vmatprep.subr.mxu0 0.0
    %246 = vmatpush1.msra.mxu0 0.0
    %247 = vmatprep.subr.mxu0 0.0
    %248 = vmatpush1.msra.mxu0 0.0
    %249 = vmatprep.mubr.f32.mxu0 0.0
    %250 = vmatmul.mubr.f32.gmra.mrb[0].mxu0 %v162
    %v251 = vpop.f32.mrb[0].mxu0
    %v252 = vadd.f32 %v184, %v251
    %v253 = vpop.f32.mrb[0].mxu0
    %254 = vmatprep.mubr.f32.mxu0 0.0
    %255 = vmatmul.mubr.f32.gmra.mrb[0].mxu0 %v163
    %v256 = vpop.f32.mrb[0].mxu0
    %v257 = vadd.f32 %v184, %v256
    %v258 = vpop.f32.mrb[0].mxu0
    %259 = vdwg.mxu0
    %v260 = vadd.f32 %v252, %v62
    %v261 = vadd.f32 %v257, %v63
    %262 = vadd.xlane.f32.xlu0 %v260
    %v263 = vpop.xlane.xlu0 %262
    %264 = vadd.xlane.f32.xlu0 %v261
    %v265 = vpop.xlane.xlu0 %264
    %v266 = vmul.f32 %v260, %v260
    %v267 = vmul.f32 %v261, %v261
    %268 = vadd.xlane.f32.xlu0 %v266
    %v269 = vpop.xlane.xlu0 %268
    %270 = vadd.xlane.f32.xlu0 %v267
    %v271 = vpop.xlane.xlu0 %270
    %v272 = vmul.f32 %v263, 0.03125
    %v273 = vmul.f32 %v265, 0.03125
    %v274 = vmul.f32 %v269, 0.03125
    %v275 = vmul.f32 %v271, 0.03125
    %v276 = vmul.f32 %v272, %v272
    %v277 = vmul.f32 %v273, %v273
    %v278 = vsub.f32 %v274, %v276
    %v279 = vsub.f32 %v275, %v277
    %v280 = vsub.f32 %v260, %v272
    %v281 = vsub.f32 %v261, %v273
    %v282 = vadd.f32 %v278, 1e-05
    %v283 = vadd.f32 %v279, 1e-05
    %v284 = vrsqrt.pop %v282
    %v285 = vrsqrt.pop %v283
    %v286 = vmul.f32 %v280, %v284
    %v287 = vmul.f32 %v281, %v285
    %v288 = vlaneseq
    %v289 = vshrl.u32 %v288, 7
    %v290 = vsub.s32 1, %v289
    %v291 = vrot.slane %v180, %v290
    %v292 = vmul.f32 %v286, %v291
    %v293 = vmul.f32 %v287, %v291
    %v294 = vlaneseq
    %v295 = vshrl.u32 %v294, 7
    %v296 = vsub.s32 2, %v295
    %v297 = vrot.slane %v180, %v296
    %v298 = vadd.f32 %v292, %v297
    %v299 = vadd.f32 %v293, %v297
    %300 = vst [vmem:[#allocation8] sm:$0xff] %v298
    %301 = vst [vmem:[#allocation8 + $0x8] sm:$0xff] %v299
    // Predicated region
    $region34: #{tpu_custom_call.1} parent=1 // pred_check
      _
    $region35: #{tpu_custom_call.1} parent=1 // pred_check_branch
      %303 = sbr.rel (0) target = $region37
    $region36: #{tpu_custom_call.1} parent=1 // pred_region
      %s305 = ssub.s32 256, 256
      %306 = vsyncadd [#allocation4], %s305
      %s307 = sshll.u32 [#allocation8], 4
      %s308 = int_to_ptr.vmem [resolvable:$true] %s307
      %313 = dma.vmem_to_hbm [thread:$0]  %s308, 256, %s5, [#allocation4], 128, 128, 8
    $region37: #{tpu_custom_call.1} parent=1 // pred_fallthru
      _
    // Predicated region
    $region38: #{tpu_custom_call.1} parent=1 // pred_check
      _
    $region39: #{tpu_custom_call.1} parent=1 // pred_check_branch
      %315 = sbr.rel (0) target = $region41
    $region40: #{tpu_custom_call.1} parent=1 // pred_region
      %316 = dma.done [#allocation4], 256
    $region41: #{tpu_custom_call.1} parent=1 // pred_fallthru
      _
    %317 = vsyncpa [#allocation3], 1
    %318 = vsyncpa [#allocation6], 1
    %319 = vsyncpa [#allocation4], 1

</llo_original>
